<compile_context>
chip_gen: v5e
topology: v5e:2x2
jax: 0.10.0
libtpu: 0.0.40
codegen_flags: <defaults>
</compile_context>

<pallas_src>
import functools

import jax
import jax.numpy as jnp
from jax import lax
from jax.experimental import pallas as pl
from jax.experimental.pallas import tpu as pltpu

_UNROLL = 8                      # rows copied per fori_loop iteration (manual unroll)
_MAX_TOKENS_PER_CALL = 1 << 15   # caps the scalar-prefetched id vector in SMEM (128 KiB)
_VMEM_TABLE_BUDGET = 36 << 20    # resident-table budget, safe on v7x (64 MiB physical)


def _round_up(n, m):
    return ((n + m - 1) // m) * m


# ----------------------------------------------------------------------------
# Kernel 1: table resident in VMEM, per-row vector copies.
# ----------------------------------------------------------------------------
def _make_vmem_gather_kernel(tile_n, rows_last):
    """rows_last (static) = number of valid (rounded to 8) rows in the final tile."""

    def gather(ids_ref, w_ref, o_ref, base, n_rows):
        # n_rows is a Python int (static) and a multiple of 8.
        n_iters = n_rows // _UNROLL

        def body(it, carry):
            j0 = it * _UNROLL
            # Manual unroll: 8 independent load/store pairs per iteration.
            for u in range(_UNROLL):
                j = j0 + u
                row = ids_ref[base + j]                      # scalar read from SMEM
                o_ref[pl.ds(j, 1), :] = w_ref[pl.ds(row, 1), :]
            return carry

        lax.fori_loop(0, n_iters, body, 0)

    def kernel(ids_ref, w_ref, o_ref):
        base = pl.program_id(0) * tile_n
        if rows_last == tile_n:
            gather(ids_ref, w_ref, o_ref, base, tile_n)
        else:
            last = pl.num_programs(0) - 1

            @pl.when(pl.program_id(0) != last)
            def _():
                gather(ids_ref, w_ref, o_ref, base, tile_n)

            @pl.when(pl.program_id(0) == last)
            def _():
                # Only the valid (rounded-up) rows; padding rows are never touched
                # and get sliced off in the wrapper.
                gather(ids_ref, w_ref, o_ref, base, rows_last)

    return kernel


# ----------------------------------------------------------------------------
# Kernel 2: table in HBM, per-row DMA gather -- issue everything, drain once.
# ----------------------------------------------------------------------------
def _make_hbm_gather_kernel(tile_n, rows_last):
    def gather(ids_ref, w_hbm, o_ref, sem, base, n_rows):
        def row_copy(j):
            # Real descriptor (same shape for start and wait); re-reading the id
            # for the wait keeps start/wait descriptors identical.
            row = ids_ref[base + j]
            return pltpu.make_async_copy(
                w_hbm.at[pl.ds(row, 1), :],
                o_ref.at[pl.ds(j, 1), :],
                sem.at[0],
            )

        n_iters = n_rows // _UNROLL

        # Phase 1: fire every row DMA against one semaphore.  Destinations are
        # disjoint rows of this output tile, so no ordering is required and the
        # issue loop never stalls on a wait (no SMEM sst->sld break either).
        def issue(it, carry):
            j0 = it * _UNROLL
            for u in range(_UNROLL):
                row_copy(j0 + u).start()
            return carry

        lax.fori_loop(0, n_iters, issue, 0)

        # Phase 2: drain.  The semaphore only counts completed bytes, and all
        # copies have identical shape, so waiting n_rows times drains them all.
        def drain(it, carry):
            j0 = it * _UNROLL
            for u in range(_UNROLL):
                row_copy(j0 + u).wait()
            return carry

        lax.fori_loop(0, n_iters, drain, 0)

    def kernel(ids_ref, w_hbm, o_ref, sem):
        base = pl.program_id(0) * tile_n
        if rows_last == tile_n:
            gather(ids_ref, w_hbm, o_ref, sem, base, tile_n)
        else:
            last = pl.num_programs(0) - 1

            @pl.when(pl.program_id(0) != last)
            def _():
                gather(ids_ref, w_hbm, o_ref, sem, base, tile_n)

            @pl.when(pl.program_id(0) == last)
            def _():
                gather(ids_ref, w_hbm, o_ref, sem, base, rows_last)

    return kernel


# ----------------------------------------------------------------------------
# One pallas_call over a bounded chunk of tokens.
# ----------------------------------------------------------------------------
def _embed_tokens(ids, table, *, tile_n, use_vmem_table, vmem_limit):
    """ids: (n,) int32 (already clamped); table: (d_vocab, cols). Returns (n, cols)."""
    (n_tokens,) = ids.shape
    d_vocab, cols = table.shape

    n_tiles = pl.cdiv(n_tokens, tile_n)
    n_pad = n_tiles * tile_n
    rows_in_last = n_tokens - (n_tiles - 1) * tile_n
    rows_last = min(tile_n, _round_up(rows_in_last, 8))      # static

    if n_pad != n_tokens:
        ids = jnp.pad(ids, (0, n_pad - n_tokens))             # pads gather row 0 (unused)

    out_spec = pl.BlockSpec((tile_n, cols), lambda i, ids_s: (i, 0))

    if use_vmem_table:
        kernel = _make_vmem_gather_kernel(tile_n, rows_last)
        # Full-array block with a constant index_map: staged into VMEM once.
        in_specs = [pl.BlockSpec((d_vocab, cols), lambda i, ids_s: (0, 0))]
        scratch = []
    else:
        kernel = _make_hbm_gather_kernel(tile_n, rows_last)
        in_specs = [pl.BlockSpec(memory_space=pl.ANY)]        # table stays in HBM
        scratch = [pltpu.SemaphoreType.DMA((1,))]

    out = pl.pallas_call(
        kernel,
        out_shape=jax.ShapeDtypeStruct((n_pad, cols), table.dtype),
        grid_spec=pltpu.PrefetchScalarGridSpec(
            num_scalar_prefetch=1,                             # ids -> SMEM
            grid=(n_tiles,),
            in_specs=in_specs,
            out_specs=out_spec,
            scratch_shapes=scratch,
        ),
        compiler_params=pltpu.CompilerParams(
            dimension_semantics=("parallel",),
            vmem_limit_bytes=vmem_limit,
        ),
    )(ids, table)

    if n_pad != n_tokens:
        out = out[:n_tokens]
    return out


# ----------------------------------------------------------------------------
# Public wrapper.
# ----------------------------------------------------------------------------
@functools.partial(jax.jit, static_argnames=("tile_n", "force_path"))
def embed_pallas(x, W_E_T, *, tile_n=512, force_path=None):
    """x: (batch, pos) int ids; W_E_T: (d_vocab, d_model) = W_E.T.

    Returns (batch, pos, d_model) with out[b, p, :] = W_E_T[x[b, p], :],
    i.e. torch.einsum('dbp -> bpd', W_E[:, x]).
    """
    batch, pos = x.shape
    d_vocab, d_model = W_E_T.shape
    n_tokens = batch * pos

    itemsize = jnp.dtype(W_E_T.dtype).itemsize
    row_bytes = d_model * itemsize
    table_bytes = d_vocab * row_bytes

    # Sub-32-bit tables: pack rows into uint32 columns (wrapper-level bitcast,
    # no data reordering) so each token row lands on whole 32-bit sublanes.
    pack = itemsize < 4 and (row_bytes % 4 == 0)
    if pack:
        per_u32 = 4 // itemsize
        table = lax.bitcast_convert_type(
            W_E_T.reshape(d_vocab, d_model // per_u32, per_u32), jnp.uint32)
    else:
        table = W_E_T

    # Tile sizing: keep the double-buffered output tile <= ~8 MiB (v7x-safe),
    # multiple of 8 (sublane), shrunk for tiny inputs.
    max_tile_rows = max(8, ((8 << 20) // max(1, 2 * row_bytes)) // 8 * 8)
    tile_n_eff = min(tile_n, max_tile_rows, _round_up(n_tokens, 8))
    tile_n_eff = max(8, (tile_n_eff // 8) * 8)
    out_tile_bytes = tile_n_eff * row_bytes

    # Path selection: resident table whenever it fits the budget and rows are
    # small (d_model < 128 / <512 B rows) or the gather volume amortizes the
    # one-time staging DMA; otherwise per-row HBM DMA gather.
    fits_vmem = (2 * table_bytes + 2 * out_tile_bytes + (1 << 20)) <= _VMEM_TABLE_BUDGET
    if force_path is None:
        use_vmem_table = fits_vmem and (
            row_bytes < 512 or d_model < 128 or n_tokens * row_bytes >= table_bytes)
    else:
        use_vmem_table = (force_path == "vmem")

    need = (2 * table_bytes if use_vmem_table else 0) + 2 * out_tile_bytes
    vmem_limit = None if need <= (12 << 20) else int(min(56 << 20, need + (16 << 20)))

    # Clamp like jnp.take (and never index outside the table for bad ids).
    ids = jnp.clip(x.reshape(n_tokens).astype(jnp.int32), 0, d_vocab - 1)

    # Chunk the token axis so the scalar-prefetched id vector stays small in SMEM.
    chunks = []
    for start in range(0, n_tokens, _MAX_TOKENS_PER_CALL):
        stop = min(n_tokens, start + _MAX_TOKENS_PER_CALL)
        chunks.append(
            _embed_tokens(ids[start:stop], table, tile_n=tile_n_eff,
                          use_vmem_table=use_vmem_table, vmem_limit=vmem_limit))
    out = chunks[0] if len(chunks) == 1 else jnp.concatenate(chunks, axis=0)

    if pack:
        out = lax.bitcast_convert_type(out, W_E_T.dtype).reshape(n_tokens, d_model)
    return out.reshape(batch, pos, d_model)


if __name__ == "__main__":
    # Small, forward-consistent shapes.
    d_vocab, d_model, batch, pos = 64, 32, 2, 8

    key = jax.random.PRNGKey(0)
    k_w, k_x, k_x2 = jax.random.split(key, 3)

    # Parameter init mirroring nn.Parameter(randn(d_model, d_vocab)/sqrt(d_model)).
    W_E = jax.random.normal(k_w, (d_model, d_vocab), dtype=jnp.float32) / jnp.sqrt(
        jnp.float32(d_model))
    # Store the table transposed ONCE (parameter-storage layout).
    W_E_T = jnp.asarray(W_E.T)  # (d_vocab, d_model)

    x = jax.random.randint(k_x, (batch, pos), 0, d_vocab, dtype=jnp.int32)
    ref = jnp.take(W_E_T, x, axis=0)  # == einsum('dbp->bpd', W_E[:, x])

    # Path 1: VMEM-resident table (default for these shapes: d_model < 128).
    out_vmem = jax.block_until_ready(embed_pallas(x, W_E_T))
    assert out_vmem.shape == (batch, pos, d_model), out_vmem.shape
    assert jnp.array_equal(out_vmem, ref)

    # Path 2: HBM per-row DMA gather (forced, to exercise the large-table path).
    out_hbm = jax.block_until_ready(embed_pallas(x, W_E_T, force_path="hbm"))
    assert jnp.array_equal(out_hbm, ref)

    # Ragged token count + small forced tile: exercises the partial-last-tile
    # specialisation on both paths.
    x2 = jax.random.randint(k_x2, (3, 8), 0, d_vocab, dtype=jnp.int32)  # 24 tokens
    ref2 = jnp.take(W_E_T, x2, axis=0)
    out2_v = jax.block_until_ready(embed_pallas(x2, W_E_T, tile_n=16))
    out2_h = jax.block_until_ready(embed_pallas(x2, W_E_T, tile_n=16, force_path="hbm"))
    assert jnp.array_equal(out2_v, ref2)
    assert jnp.array_equal(out2_h, ref2)

    print("KERNEL_OK")
</pallas_src>

<mosaic_0001>
module attributes {stable_mosaic.version = 11 : i64} {
  func.func @kernel(%arg0: i32, %arg1: memref<16xi32, #tpu.memory_space<smem>>, %arg2: memref<64x32xf32, #tpu.memory_space<vmem>>, %arg3: memref<16x32xf32, #tpu.memory_space<vmem>>) attributes {dimension_semantics = [#tpu.dimension_semantics<parallel>], iteration_bounds = array<i64: 1>, scalar_prefetch = 1 : i64, scratch_operands = 0 : i64, tpu.core_type = #tpu.core_type<tc>, window_params = [{pipeline_mode = #tpu.pipeline_mode<synchronous>, transform_indices = @transform_0, window_bounds = array<i64: 64, 32>}, {transform_indices = @transform_1, window_bounds = array<i64: 16, 32>}]} {
    %c16_i32 = arith.constant 16 : i32
    %0 = arith.muli %arg0, %c16_i32 : i32
    %c0_i32 = arith.constant 0 : i32
    %c2_i32 = arith.constant 2 : i32
    %1 = arith.addi %c0_i32, %c2_i32 : i32
    %c1_i32 = arith.constant 1 : i32
    scf.for %arg4 = %c0_i32 to %1 step %c1_i32  : i32 {
      %c8_i32 = arith.constant 8 : i32
      %2 = arith.muli %arg4, %c8_i32 : i32
      %c0_i32_1 = arith.constant 0 : i32
      %3 = arith.addi %2, %c0_i32_1 : i32
      %4 = arith.addi %0, %3 : i32
      %5 = arith.index_cast %4 : i32 to index
      %6 = memref.load %arg1[%5] : memref<16xi32, #tpu.memory_space<smem>>
      %7 = arith.index_cast %6 : i32 to index
      %c0 = arith.constant 0 : index
      %8 = vector.load %arg2[%7, %c0] : memref<64x32xf32, #tpu.memory_space<vmem>>, vector<1x32xf32>
      %9 = arith.index_cast %3 : i32 to index
      %c0_2 = arith.constant 0 : index
      %10 = vector.load %arg3[%9, %c0_2] : memref<16x32xf32, #tpu.memory_space<vmem>>, vector<1x32xf32>
      tpu.vector_store %arg3[%9, %c0_2], %8 {strides = array<i32>} : memref<16x32xf32, #tpu.memory_space<vmem>>, vector<1x32xf32>,
      %c1_i32_3 = arith.constant 1 : i32
      %11 = arith.addi %2, %c1_i32_3 : i32
      %12 = arith.addi %0, %11 : i32
      %13 = arith.index_cast %12 : i32 to index
      %14 = memref.load %arg1[%13] : memref<16xi32, #tpu.memory_space<smem>>
      %15 = arith.index_cast %14 : i32 to index
      %c0_4 = arith.constant 0 : index
      %16 = vector.load %arg2[%15, %c0_4] : memref<64x32xf32, #tpu.memory_space<vmem>>, vector<1x32xf32>
      %17 = arith.index_cast %11 : i32 to index
      %c0_5 = arith.constant 0 : index
      %18 = vector.load %arg3[%17, %c0_5] : memref<16x32xf32, #tpu.memory_space<vmem>>, vector<1x32xf32>
      tpu.vector_store %arg3[%17, %c0_5], %16 {strides = array<i32>} : memref<16x32xf32, #tpu.memory_space<vmem>>, vector<1x32xf32>,
      %c2_i32_6 = arith.constant 2 : i32
      %19 = arith.addi %2, %c2_i32_6 : i32
      %20 = arith.addi %0, %19 : i32
      %21 = arith.index_cast %20 : i32 to index
      %22 = memref.load %arg1[%21] : memref<16xi32, #tpu.memory_space<smem>>
      %23 = arith.index_cast %22 : i32 to index
      %c0_7 = arith.constant 0 : index
      %24 = vector.load %arg2[%23, %c0_7] : memref<64x32xf32, #tpu.memory_space<vmem>>, vector<1x32xf32>
      %25 = arith.index_cast %19 : i32 to index
      %c0_8 = arith.constant 0 : index
      %26 = vector.load %arg3[%25, %c0_8] : memref<16x32xf32, #tpu.memory_space<vmem>>, vector<1x32xf32>
      tpu.vector_store %arg3[%25, %c0_8], %24 {strides = array<i32>} : memref<16x32xf32, #tpu.memory_space<vmem>>, vector<1x32xf32>,
      %c3_i32 = arith.constant 3 : i32
      %27 = arith.addi %2, %c3_i32 : i32
      %28 = arith.addi %0, %27 : i32
      %29 = arith.index_cast %28 : i32 to index
      %30 = memref.load %arg1[%29] : memref<16xi32, #tpu.memory_space<smem>>
      %31 = arith.index_cast %30 : i32 to index
      %c0_9 = arith.constant 0 : index
      %32 = vector.load %arg2[%31, %c0_9] : memref<64x32xf32, #tpu.memory_space<vmem>>, vector<1x32xf32>
      %33 = arith.index_cast %27 : i32 to index
      %c0_10 = arith.constant 0 : index
      %34 = vector.load %arg3[%33, %c0_10] : memref<16x32xf32, #tpu.memory_space<vmem>>, vector<1x32xf32>
      tpu.vector_store %arg3[%33, %c0_10], %32 {strides = array<i32>} : memref<16x32xf32, #tpu.memory_space<vmem>>, vector<1x32xf32>,
      %c4_i32 = arith.constant 4 : i32
      %35 = arith.addi %2, %c4_i32 : i32
      %36 = arith.addi %0, %35 : i32
      %37 = arith.index_cast %36 : i32 to index
      %38 = memref.load %arg1[%37] : memref<16xi32, #tpu.memory_space<smem>>
      %39 = arith.index_cast %38 : i32 to index
      %c0_11 = arith.constant 0 : index
      %40 = vector.load %arg2[%39, %c0_11] : memref<64x32xf32, #tpu.memory_space<vmem>>, vector<1x32xf32>
      %41 = arith.index_cast %35 : i32 to index
      %c0_12 = arith.constant 0 : index
      %42 = vector.load %arg3[%41, %c0_12] : memref<16x32xf32, #tpu.memory_space<vmem>>, vector<1x32xf32>
      tpu.vector_store %arg3[%41, %c0_12], %40 {strides = array<i32>} : memref<16x32xf32, #tpu.memory_space<vmem>>, vector<1x32xf32>,
      %c5_i32 = arith.constant 5 : i32
      %43 = arith.addi %2, %c5_i32 : i32
      %44 = arith.addi %0, %43 : i32
      %45 = arith.index_cast %44 : i32 to index
      %46 = memref.load %arg1[%45] : memref<16xi32, #tpu.memory_space<smem>>
      %47 = arith.index_cast %46 : i32 to index
      %c0_13 = arith.constant 0 : index
      %48 = vector.load %arg2[%47, %c0_13] : memref<64x32xf32, #tpu.memory_space<vmem>>, vector<1x32xf32>
      %49 = arith.index_cast %43 : i32 to index
      %c0_14 = arith.constant 0 : index
      %50 = vector.load %arg3[%49, %c0_14] : memref<16x32xf32, #tpu.memory_space<vmem>>, vector<1x32xf32>
      tpu.vector_store %arg3[%49, %c0_14], %48 {strides = array<i32>} : memref<16x32xf32, #tpu.memory_space<vmem>>, vector<1x32xf32>,
      %c6_i32 = arith.constant 6 : i32
      %51 = arith.addi %2, %c6_i32 : i32
      %52 = arith.addi %0, %51 : i32
      %53 = arith.index_cast %52 : i32 to index
      %54 = memref.load %arg1[%53] : memref<16xi32, #tpu.memory_space<smem>>
      %55 = arith.index_cast %54 : i32 to index
      %c0_15 = arith.constant 0 : index
      %56 = vector.load %arg2[%55, %c0_15] : memref<64x32xf32, #tpu.memory_space<vmem>>, vector<1x32xf32>
      %57 = arith.index_cast %51 : i32 to index
      %c0_16 = arith.constant 0 : index
      %58 = vector.load %arg3[%57, %c0_16] : memref<16x32xf32, #tpu.memory_space<vmem>>, vector<1x32xf32>
      tpu.vector_store %arg3[%57, %c0_16], %56 {strides = array<i32>} : memref<16x32xf32, #tpu.memory_space<vmem>>, vector<1x32xf32>,
      %c7_i32 = arith.constant 7 : i32
      %59 = arith.addi %2, %c7_i32 : i32
      %60 = arith.addi %0, %59 : i32
      %61 = arith.index_cast %60 : i32 to index
      %62 = memref.load %arg1[%61] : memref<16xi32, #tpu.memory_space<smem>>
      %63 = arith.index_cast %62 : i32 to index
      %c0_17 = arith.constant 0 : index
      %64 = vector.load %arg2[%63, %c0_17] : memref<64x32xf32, #tpu.memory_space<vmem>>, vector<1x32xf32>
      %65 = arith.index_cast %59 : i32 to index
      %c0_18 = arith.constant 0 : index
      %66 = vector.load %arg3[%65, %c0_18] : memref<16x32xf32, #tpu.memory_space<vmem>>, vector<1x32xf32>
      tpu.vector_store %arg3[%65, %c0_18], %64 {strides = array<i32>} : memref<16x32xf32, #tpu.memory_space<vmem>>, vector<1x32xf32>,
    }
    %c2_i32_0 = arith.constant 2 : i32
    return
  }
  func.func @transform_0(%arg0: i32, %arg1: memref<16xi32, #tpu.memory_space<smem>>) -> (i32, i32) {
    %c0_i32 = arith.constant 0 : i32
    %c0_i32_0 = arith.constant 0 : i32
    %c0_i32_1 = arith.constant 0 : i32
    return %c0_i32, %c0_i32_0 : i32, i32
  }
  func.func @transform_1(%arg0: i32, %arg1: memref<16xi32, #tpu.memory_space<smem>>) -> (i32, i32) {
    %c0_i32 = arith.constant 0 : i32
    %c0_i32_0 = arith.constant 0 : i32
    return %arg0, %c0_i32 : i32, i32
  }
}

</mosaic_0001>

<llo_original>
// kernel: embed_pallas.1
$region0: #{embed_pallas.1}
  #allocation0 [shape = 'u32[]', space=smem, size = 0x4, offset = 0x4, fixed_abs, tag = 'smem constant byte address 0x4 - core index']
  #allocation1 [shape = 'u32[72,128]{1,0:T(1,128)}', space=vmem, size = 0x9000, scoped, tag = 'internal scratch']
  #allocation2 [shape = 's32[1]{0}', space=sflag, size = 0x4, scoped, tag = 'scoped memory for embed_pallas.1']
  #allocation3 [shape = 'u8[512]{0}', space=smem, size = 0x200, scoped, tag = 'prefetched SMEM operand 0']
  %s0 = inlined_call_operand.vmem [shape: s32[16], index: 0, kind: input, shape index: {}]
  %s1 = inlined_call_operand.vmem [shape: f32[64,32], index: 1, kind: input, shape index: {}]
  %s2 = inlined_call_operand.hbm [shape: f32[16,32], index: 2, kind: output, shape index: {}]
  %s3 = sld [smem:[#allocation0]]
  $region21: #{embed_pallas.1} parent=0
    _
  %s5 = ssub.s32 1, %s3
  %s6 = scalar_select 0, %s5, %s3
  %s8 = sshll.u32 %s0, 4
  %s9 = int_to_ptr.vmem [resolvable:$true] %s8
  %11 = dma.vmem_to_smem %s9, 16, [#allocation3], [#allocation2]
  %13 = dma.done [#allocation2], 16
  %14 = sfence
  $region1: #{embed_pallas.1} parent=0
    #allocation4 [shape = 'u8[8192]{0}', space=vmem, size = 0x2000, scoped, tag = 'output window, operand 0, single buffered']
    #allocation5 [shape = 's32[1]{0}', space=sflag, size = 0x4, scoped, tag = 'scoped memory for embed_pallas.1']
    %15 = vsyncpa [#allocation5], 0
    // Predicated region
    $region2: #{embed_pallas.1} parent=1 // pred_check
      _
    $region3: #{embed_pallas.1} parent=1 // pred_check_branch
      %17 = sbr.rel (0) target = $region5
    $region4: #{embed_pallas.1} parent=1 // pred_region
      _
    $region5: #{embed_pallas.1} parent=1 // pred_fallthru
      _
    %s18 = smul.u32 0, 16
    loop: start=0, step=1, limit=2
    $region6: #{embed_pallas.1} parent=1 // loop_pre_header
      _
    $region7: #{embed_pallas.1} parent=1 // loop_header
      %s20 = sphi 0, %s24
      %p21 = scmp.ge.s32.totalorder %s20, 2
    $region8: #{embed_pallas.1} parent=1 // loop_header_branch
      %23 = sbr.rel (%p21) target = $region12
    $region9: #{embed_pallas.1} parent=1 // loop_body
      %s25 = smul.u32 %s20, 8
      %s26 = sadd.s32 %s18, %s25
      %s27 = sld [smem:[#allocation3 + %s26]]
      %s28 = scalar_lea.vmem %s1, %s27
      %v29 = vld [vmem:[%s28] sm:$0x1]
      %s30 = scalar_lea.vmem [#allocation4], %s25
      %vm31 = vcmask 253952
      %32 = vst.msk [vmem:[%s30] sm:$0x1] %vm31, %v29
      %s33 = sadd.s32 %s25, 1
      %s34 = sadd.s32 %s18, %s33
      %s35 = sld [smem:[#allocation3 + %s34]]
      %s36 = scalar_lea.vmem %s1, %s35
      %v37 = vld [vmem:[%s36] sm:$0x1]
      %s38 = scalar_lea.vmem [#allocation4], %s33
      %39 = vst.msk [vmem:[%s38] sm:$0x1] %vm31, %v37
      %s40 = sadd.s32 %s25, 2
      %s41 = sadd.s32 %s18, %s40
      %s42 = sld [smem:[#allocation3 + %s41]]
      %s43 = scalar_lea.vmem %s1, %s42
      %v44 = vld [vmem:[%s43] sm:$0x1]
      %s45 = scalar_lea.vmem [#allocation4], %s40
      %46 = vst.msk [vmem:[%s45] sm:$0x1] %vm31, %v44
      %s47 = sadd.s32 %s25, 3
      %s48 = sadd.s32 %s18, %s47
      %s49 = sld [smem:[#allocation3 + %s48]]
      %s50 = scalar_lea.vmem %s1, %s49
      %v51 = vld [vmem:[%s50] sm:$0x1]
      %s52 = scalar_lea.vmem [#allocation4], %s47
      %53 = vst.msk [vmem:[%s52] sm:$0x1] %vm31, %v51
      %s54 = sadd.s32 %s25, 4
      %s55 = sadd.s32 %s18, %s54
      %s56 = sld [smem:[#allocation3 + %s55]]
      %s57 = scalar_lea.vmem %s1, %s56
      %v58 = vld [vmem:[%s57] sm:$0x1]
      %s59 = scalar_lea.vmem [#allocation4], %s54
      %60 = vst.msk [vmem:[%s59] sm:$0x1] %vm31, %v58
      %s61 = sadd.s32 %s25, 5
      %s62 = sadd.s32 %s18, %s61
      %s63 = sld [smem:[#allocation3 + %s62]]
      %s64 = scalar_lea.vmem %s1, %s63
      %v65 = vld [vmem:[%s64] sm:$0x1]
      %s66 = scalar_lea.vmem [#allocation4], %s61
      %67 = vst.msk [vmem:[%s66] sm:$0x1] %vm31, %v65
      %s68 = sadd.s32 %s25, 6
      %s69 = sadd.s32 %s18, %s68
      %s70 = sld [smem:[#allocation3 + %s69]]
      %s71 = scalar_lea.vmem %s1, %s70
      %v72 = vld [vmem:[%s71] sm:$0x1]
      %s73 = scalar_lea.vmem [#allocation4], %s68
      %74 = vst.msk [vmem:[%s73] sm:$0x1] %vm31, %v72
      %s75 = sadd.s32 %s25, 7
      %s76 = sadd.s32 %s18, %s75
      %s77 = sld [smem:[#allocation3 + %s76]]
      %s78 = scalar_lea.vmem %s1, %s77
      %v79 = vld [vmem:[%s78] sm:$0x1]
      %s80 = scalar_lea.vmem [#allocation4], %s75
      %81 = vst.msk [vmem:[%s80] sm:$0x1] %vm31, %v79
    $region10: #{embed_pallas.1} parent=1 // loop_footer
      %s24 = sadd.s32 1, %s20
    $region11: #{embed_pallas.1} parent=1 // loop_footer_branch
      %19 = sbr.rel target = $region7
    $region12: #{embed_pallas.1} parent=1 // loop_exit
      _
    // Predicated region
    $region13: #{embed_pallas.1} parent=1 // pred_check
      _
    $region14: #{embed_pallas.1} parent=1 // pred_check_branch
      %83 = sbr.rel (0) target = $region16
    $region15: #{embed_pallas.1} parent=1 // pred_region
      %85 = vsyncadd [#allocation5], 0
      %s86 = sshll.u32 [#allocation4], 4
      %s87 = int_to_ptr.vmem [resolvable:$true] %s86
      %s88 = sshll.u32 %s2, 4
      %s89 = int_to_ptr.hbm [resolvable:$true] %s88
      %94 = dma.vmem_to_hbm [thread:$0]  %s87, 256, %s89, [#allocation5], 128, 128, 8
    $region16: #{embed_pallas.1} parent=1 // pred_fallthru
      _
    // Predicated region
    $region17: #{embed_pallas.1} parent=1 // pred_check
      _
    $region18: #{embed_pallas.1} parent=1 // pred_check_branch
      %96 = sbr.rel (0) target = $region20
    $region19: #{embed_pallas.1} parent=1 // pred_region
      %98 = dma.done [#allocation5], 256
    $region20: #{embed_pallas.1} parent=1 // pred_fallthru
      _
    %99 = vsyncpa [#allocation5], 1

</llo_original>
